<compile_context>
chip_gen: v7x
topology: tpu7x:2x2x1
jax: 0.10.0
libtpu: 0.0.40
codegen_flags: <defaults>
</compile_context>

<pallas_src>
import jax
import jax.numpy as jnp
from jax.experimental import pallas as pl
from jax.experimental.pallas import tpu as pltpu


# ---------------------------------------------------------------------------
# Primary path: aliased no-op (zero data movement inside the kernel).
# ---------------------------------------------------------------------------
def _identity_alias_kernel(x_ref, o_ref):
    # Output buffer IS the input buffer (input_output_aliases={0: 0}); there is
    # nothing to compute or move.  `touch` pins a fake read/write dependency so
    # the aliased output is treated as produced by this call.
    del x_ref
    pltpu.touch(o_ref)


def _identity_alias(tensor):
    return pl.pallas_call(
        _identity_alias_kernel,
        out_shape=jax.ShapeDtypeStruct(tensor.shape, tensor.dtype),
        in_specs=[pl.BlockSpec(memory_space=pl.ANY)],
        out_specs=pl.BlockSpec(memory_space=pl.ANY),
        input_output_aliases={0: 0},
    )(tensor)


# ---------------------------------------------------------------------------
# Fallback path: tuned HBM -> VMEM -> HBM streaming copy.
# ---------------------------------------------------------------------------
def _identity_copy_kernel(x_ref, o_ref):
    o_ref[...] = x_ref[...]


def _pick_layout(shape, total):
    """Choose a lane-dense (rows, cols) 2-D view of a contiguous tensor."""
    for c in (16384, 8192, 4096, 2048, 1024, 512, 256, 128):
        if total % c == 0:
            return total // c, c
    # Fall back to the original trailing dim (a full-dim block is always legal).
    cols = shape[-1] if len(shape) >= 1 else 1
    return total // cols, cols


def _identity_copy(tensor, max_block_bytes=None):
    total = tensor.size
    orig_shape = tensor.shape
    rows, cols = _pick_layout(orig_shape, total)
    x2d = tensor.reshape(rows, cols)

    itemsize = jnp.dtype(tensor.dtype).itemsize
    bytes_per_row = cols * itemsize

    if max_block_bytes is None:
        # Per-generation sizing: ~13.5 MiB blocks on v5e/v6e (128 MiB VMEM),
        # ~7.5 MiB on v7x (64 MiB/TC), derived from the chip's actual capacity.
        try:
            vmem_cap = pltpu.get_tpu_info().vmem_capacity_bytes
        except Exception:
            vmem_cap = 64 * 1024 * 1024  # conservative (v7x per-TC)
        scoped_target = min(vmem_cap // 2, 56 * 1024 * 1024)
        max_block_bytes = max(2 * 1024 * 1024, (scoped_target - (2 << 20)) // 4)

    # Rows per block: as many as fit the budget, rounded to a multiple of 16
    # (full sublane packing for bf16/fp8), never below 16, never above rows.
    cap = max(16, (max_block_bytes // bytes_per_row) // 16 * 16)
    row_tile = min(rows, cap)

    # v7x megacore: make sure there are >= 2 grid blocks for non-tiny tensors so
    # dimension_semantics=("parallel",) can shard the stream across both TCs.
    if row_tile >= rows and rows >= 32:
        half = (rows + 1) // 2
        row_tile = max(16, (half + 15) // 16 * 16)
        if row_tile >= rows:
            row_tile = rows

    block_bytes = row_tile * bytes_per_row
    # Double-buffered input + output blocks plus headroom; capped below the
    # smallest physical VMEM among target chips (64 MiB/TC on v7x).
    vmem_limit = int(min(56 * 1024 * 1024,
                         max(16 * 1024 * 1024, 4 * block_bytes + (2 << 20))))

    # Tail block (if rows % row_tile != 0) is handled by Pallas masking.
    grid = (pl.cdiv(rows, row_tile),)

    out2d = pl.pallas_call(
        _identity_copy_kernel,
        out_shape=jax.ShapeDtypeStruct((rows, cols), tensor.dtype),
        grid_spec=pltpu.PrefetchScalarGridSpec(
            num_scalar_prefetch=0,
            grid=grid,
            in_specs=[pl.BlockSpec((row_tile, cols), lambda i: (i, 0))],
            out_specs=pl.BlockSpec((row_tile, cols), lambda i: (i, 0)),
        ),
        compiler_params=pltpu.CompilerParams(
            dimension_semantics=("parallel",),
            vmem_limit_bytes=vmem_limit,
        ),
        cost_estimate=pl.CostEstimate(flops=0, transcendentals=0,
                                      bytes_accessed=2 * total * itemsize),
    )(x2d)

    return out2d.reshape(orig_shape)


# ---------------------------------------------------------------------------
# Public wrapper (matches Identity.forward signature).
# ---------------------------------------------------------------------------
_ALIAS_WORKS = None  # None = untried, True/False = cached probe result


def identity(tensor, *args, **kwargs):
    """Pallas equivalent of `Identity.forward`: returns `tensor` unchanged."""
    del args, kwargs  # Identity ignores everything except the tensor.
    if tensor.ndim == 0 or tensor.size == 0:
        return tensor

    global _ALIAS_WORKS
    if _ALIAS_WORKS is None:
        try:
            out = jax.block_until_ready(_identity_alias(tensor))
            _ALIAS_WORKS = True
            return out
        except Exception:
            # Lowering/runtime issue with the aliased no-op on this backend:
            # fall back to the tuned streaming copy from here on.
            _ALIAS_WORKS = False
    if _ALIAS_WORKS:
        return _identity_alias(tensor)
    return _identity_copy(tensor)


if __name__ == "__main__":
    key = jax.random.PRNGKey(0)
    k1, k2, k3 = jax.random.split(key, 3)

    # Case 1: typical 4-D activation tensor, f32 (primary aliased path).
    x1 = jax.random.normal(k1, (2, 4, 16, 16), dtype=jnp.float32)
    y1 = jax.block_until_ready(identity(x1))
    assert y1.shape == x1.shape and y1.dtype == x1.dtype
    assert jnp.array_equal(y1, x1)

    # Case 2: odd shape + bf16 (trailing dim not a multiple of 128).
    x2 = jax.random.normal(k2, (3, 5, 96), dtype=jnp.float32).astype(jnp.bfloat16)
    y2 = jax.block_until_ready(identity(x2))
    assert y2.shape == x2.shape and y2.dtype == x2.dtype
    assert jnp.array_equal(y2, x2)

    # Case 3: exercise the streaming-copy fallback directly with a small block
    # budget -> lane-dense (rows=68, cols=16384) view, multi-step "parallel"
    # grid with a masked tail block.
    x3 = jax.random.normal(k3, (2176, 512), dtype=jnp.float32)
    y3 = jax.block_until_ready(_identity_copy(x3, max_block_bytes=128 * 1024))
    assert y3.shape == x3.shape and y3.dtype == x3.dtype
    assert jnp.array_equal(y3, x3)

    # Case 4: auto-sized copy path (per-generation block sizing + the >=2-block
    # split that keeps both v7x TensorCores busy).
    x4 = jax.random.normal(k1, (256, 2048), dtype=jnp.float32)
    y4 = jax.block_until_ready(_identity_copy(x4))
    assert y4.shape == x4.shape and y4.dtype == x4.dtype
    assert jnp.array_equal(y4, x4)

    print("KERNEL_OK")
</pallas_src>

<mosaic_0001>
module attributes {stable_mosaic.version = 11 : i64} {
  func.func @_identity_alias_kernel(%arg0: memref<2x4x16x16xf32, #tpu.memory_space<any>>, %arg1: memref<2x4x16x16xf32, #tpu.memory_space<any>>) attributes {dimension_semantics = [], scalar_prefetch = 0 : i64, scratch_operands = 0 : i64, tpu.core_type = #tpu.core_type<tc>} {
    return
  }
}

module attributes {stable_mosaic.version = 11 : i64} {
  func.func @_identity_copy_kernel(%arg0: i32, %arg1: memref<1x2048xf32, #tpu.memory_space<vmem>>, %arg2: memref<1x2048xf32, #tpu.memory_space<vmem>>) attributes {dimension_semantics = [#tpu.dimension_semantics<parallel>], iteration_bounds = array<i64: 1>, scalar_prefetch = 0 : i64, scratch_operands = 0 : i64, tpu.core_type = #tpu.core_type<tc>, window_params = [{transform_indices = @transform_0, window_bounds = array<i64: 1, 2048>}, {transform_indices = @transform_1, window_bounds = array<i64: 1, 2048>}]} {
    %c0 = arith.constant 0 : index
    %c0_0 = arith.constant 0 : index
    %0 = vector.load %arg1[%c0, %c0_0] : memref<1x2048xf32, #tpu.memory_space<vmem>>, vector<1x2048xf32>
    %c0_1 = arith.constant 0 : index
    %c0_2 = arith.constant 0 : index
    %1 = vector.load %arg2[%c0_1, %c0_2] : memref<1x2048xf32, #tpu.memory_space<vmem>>, vector<1x2048xf32>
    tpu.vector_store %arg2[%c0_1, %c0_2], %0 {strides = array<i32>} : memref<1x2048xf32, #tpu.memory_space<vmem>>, vector<1x2048xf32>,
    return
  }
  func.func @transform_0(%arg0: i32) -> (i32, i32) {
    %c0_i32 = arith.constant 0 : i32
    %c0_i32_0 = arith.constant 0 : i32
    return %arg0, %c0_i32 : i32, i32
  }
  func.func @transform_1(%arg0: i32) -> (i32, i32) {
    %c0_i32 = arith.constant 0 : i32
    %c0_i32_0 = arith.constant 0 : i32
    return %arg0, %c0_i32 : i32, i32
  }
}

</mosaic_0001>

<llo_original>
// kernel: tpu_custom_call.1
$region0: #{tpu_custom_call.1}
  #allocation0 [shape = 'u32[]', space=smem, size = 0x4, offset = 0x4, fixed_abs, tag = 'smem constant byte address 0x4 - core index']
  #allocation1 [shape = 'u32[144,128]{1,0:T(1,128)}', space=vmem, size = 0x12000, scoped, tag = 'internal scratch']
  %s0 = inlined_call_operand.hbm [shape: f32[2,4,16,16], index: 0, kind: input, shape index: {}, may-alias: {0,1}]
  %s1 = inlined_call_operand.hbm [shape: f32[2,4,16,16], index: 1, kind: output, shape index: {}, may-alias: {0,1}]
  %s2 = sld [smem:[#allocation0]]
  $region2: #{tpu_custom_call.1} parent=0
    _
  %s4 = ssub.s32 1, %s2
  %s5 = scalar_select 0, %s4, %s2

// kernel: tpu_custom_call.1
$region0: #{tpu_custom_call.1}
  #allocation0 [shape = 'u32[]', space=smem, size = 0x4, offset = 0x4, fixed_abs, tag = 'smem constant byte address 0x4 - core index']
  #allocation1 [shape = 'u32[144,128]{1,0:T(1,128)}', space=vmem, size = 0x12000, scoped, tag = 'internal scratch']
  %s0 = inlined_call_operand.hbm [shape: f32[1,2048], index: 0, kind: input, shape index: {}]
  %s1 = inlined_call_operand.hbm [shape: f32[1,2048], index: 1, kind: output, shape index: {}]
  %s2 = sld [smem:[#allocation0]]
  $region18: #{tpu_custom_call.1} parent=0
    _
  %s4 = ssub.s32 1, %s2
  %s5 = scalar_select 0, %s4, %s2
  $region1: #{tpu_custom_call.1} parent=0
    #allocation2 [shape = 'u8[8192]{0}', space=vmem, size = 0x2000, scoped, tag = 'input window, operand 0, single buffered']
    #allocation3 [shape = 's32[1]{0}', space=sflag, size = 0x4, scoped, tag = 'scoped memory for tpu_custom_call.1']
    #allocation4 [shape = 's32[1]{0}', space=sflag, size = 0x4, scoped, tag = 'scoped memory for tpu_custom_call.1']
    #allocation5 [shape = 'u8[8192]{0}', space=vmem, size = 0x2000, scoped, tag = 'output window, operand 0, single buffered']
    %6 = vsyncpa [#allocation3], 0
    %7 = vsyncpa [#allocation4], 0
    // Predicated region
    $region2: #{tpu_custom_call.1} parent=1 // pred_check
      _
    $region3: #{tpu_custom_call.1} parent=1 // pred_check_branch
      %9 = sbr.rel (0) target = $region5
    $region4: #{tpu_custom_call.1} parent=1 // pred_region
      %s11 = ssub.s32 256, 256
      %12 = vsyncadd [#allocation3], %s11
      %s14 = sshll.u32 [#allocation2], 4
      %s15 = int_to_ptr.vmem [resolvable:$true] %s14
      %17 = dma.hbm_to_vmem [thread:$0]  %s0, 256, %s15, [#allocation3]
    $region5: #{tpu_custom_call.1} parent=1 // pred_fallthru
      _
    // Predicated region
    $region6: #{tpu_custom_call.1} parent=1 // pred_check
      _
    $region7: #{tpu_custom_call.1} parent=1 // pred_check_branch
      %19 = sbr.rel (0) target = $region9
    $region8: #{tpu_custom_call.1} parent=1 // pred_region
      %20 = dma.done [#allocation3], 256
    $region9: #{tpu_custom_call.1} parent=1 // pred_fallthru
      _
    %v21 = vld [vmem:[#allocation2] sm:$0xff]
    %v22 = vld [vmem:[#allocation2 + $0x8] sm:$0xff]
    %23 = vst [vmem:[#allocation5] sm:$0xff] %v21
    %24 = vst [vmem:[#allocation5 + $0x8] sm:$0xff] %v22
    // Predicated region
    $region10: #{tpu_custom_call.1} parent=1 // pred_check
      _
    $region11: #{tpu_custom_call.1} parent=1 // pred_check_branch
      %26 = sbr.rel (0) target = $region13
    $region12: #{tpu_custom_call.1} parent=1 // pred_region
      %s28 = ssub.s32 256, 256
      %29 = vsyncadd [#allocation4], %s28
      %s31 = sshll.u32 [#allocation5], 4
      %s32 = int_to_ptr.vmem [resolvable:$true] %s31
      %34 = dma.vmem_to_hbm [thread:$0]  %s32, 256, %s1, [#allocation4]
    $region13: #{tpu_custom_call.1} parent=1 // pred_fallthru
      _
    // Predicated region
    $region14: #{tpu_custom_call.1} parent=1 // pred_check
      _
    $region15: #{tpu_custom_call.1} parent=1 // pred_check_branch
      %36 = sbr.rel (0) target = $region17
    $region16: #{tpu_custom_call.1} parent=1 // pred_region
      %37 = dma.done [#allocation4], 256
    $region17: #{tpu_custom_call.1} parent=1 // pred_fallthru
      _
    %38 = vsyncpa [#allocation3], 1
    %39 = vsyncpa [#allocation4], 1

</llo_original>
